<compile_context>
chip_gen: v7x
topology: tpu7x:2x2x1
jax: 0.10.0
libtpu: 0.0.40
codegen_flags: <defaults>
</compile_context>

<pallas_src>
import functools
import math

import jax
import jax.numpy as jnp
import numpy as np
from jax.experimental import pallas as pl
from jax.experimental.pallas import tpu as pltpu


def _round_up(x, m):
    return ((x + m - 1) // m) * m


def _cdiv(a, b):
    return -(-a // b)


def _hypernet_kernel(d_in, x2_ref, w1_ref, b1_ref, w2_ref, b2_ref,
                     w3_ref, b3_ref, o_ref):
    """One output-feature tile of the encoded-input MLP.

    x2_ref : (Bp, 2*Din) f32, equal to [x | x] (wrapper-duplicated raw input)
    w1_ref : (2*Din, H1) compute dtype    b1_ref : (1, H1) f32
    w2_ref : (H1,  H2)  compute dtype     b2_ref : (1, H2) f32
    w3_ref : (H2,  TN)  compute dtype  -- current final-layer output tile
    b3_ref : (1,   TN)  f32
    o_ref  : (Bp,  TN)  out dtype, lane-dense (TN % 128 == 0)
    """
    x2 = x2_ref[...]                                          # f32 elementwise
    col = jax.lax.broadcasted_iota(jnp.int32, x2.shape, 1)
    # "cos|sin" encoding built in-register: [cos(x) | sin(x)] without a
    # lane-unaligned concatenate -> one fused first-layer matmul (K = 2*Din).
    enc = jnp.where(col < d_in, jnp.cos(x2), jnp.sin(x2))

    h = jnp.dot(enc.astype(w1_ref.dtype), w1_ref[...],
                preferred_element_type=jnp.float32) + b1_ref[...]
    h = jnp.where(h >= 0, h, 0.01 * h)                        # LeakyReLU(0.01)

    h = jnp.dot(h.astype(w2_ref.dtype), w2_ref[...],
                preferred_element_type=jnp.float32) + b2_ref[...]
    h = jnp.where(h >= 0, h, 0.01 * h)

    o_ref[...] = (jnp.dot(h.astype(w3_ref.dtype), w3_ref[...],
                          preferred_element_type=jnp.float32)
                  + b3_ref[...]).astype(o_ref.dtype)


def _vmem_capacity_bytes():
    """Per-TensorCore VMEM capacity; falls back to 128 MiB if the query fails."""
    try:
        return int(pltpu.get_tpu_info().vmem_capacity_bytes)
    except Exception:
        return 128 << 20


def _generation_config():
    """Per-generation streamed-tile budget / VMEM cap / minimum tile count."""
    vmem_cap = _vmem_capacity_bytes()
    if vmem_cap <= (64 << 20):
        # v7x-class: 64 MiB VMEM per TC, 2 TCs share HBM. Keep headroom for
        # Mosaic internal scratch, keep >=4 output tiles so both cores stay fed.
        return dict(stream_budget=16 << 20,
                    vmem_cap=min(48 << 20, (vmem_cap * 7) // 8),
                    min_tiles=4)
    # v5e / v6e: 128 MiB VMEM, single TensorCore -> bigger streamed tiles.
    return dict(stream_budget=40 << 20,
                vmem_cap=min(96 << 20, (vmem_cap * 7) // 8),
                min_tiles=2)


def _choose_tiles(flat_out, h2, w_itemsize, out_itemsize, b_pad,
                  stream_budget_bytes, min_tiles):
    """Budget-derived final-layer N tile.

    Per 128 output columns the double-buffered streamed footprint is
      2 * 128 * (H2*w_bytes + 4 (b3, f32) + Bp*out_bytes).
    tn is the largest 128-multiple that fits stream_budget_bytes, then shrunk
    so the grid has at least `min_tiles` steps. Padding waste beyond
    round_up(flat_out, 128) is bounded by < num_tiles*128 columns, negligible
    for MB-scale tiles.
    """
    lane_out = _round_up(flat_out, 128)
    blocks = lane_out // 128
    per_block = 2 * 128 * (h2 * w_itemsize + 4 + b_pad * out_itemsize)
    max_blocks_per_tile = max(1, stream_budget_bytes // per_block)
    num_tiles = max(_cdiv(blocks, max_blocks_per_tile), min(min_tiles, blocks))
    tn = _cdiv(blocks, num_tiles) * 128
    n_pad = num_tiles * tn
    return tn, n_pad


def hypernet_forward(inputs, params, input_shapes, output_shapes, *,
                     compute_dtype=jnp.bfloat16, out_dtype=None):
    """JAX wrapper reproducing HyperNet.forward(**inputs).

    compute_dtype controls the dtype of the matmul operands (weights and the
    activation cast right at each dot); accumulation is always f32. out_dtype
    (defaults to compute_dtype) is the kernel's HBM writeback dtype; the final
    result is upcast to f32 in the wrapper. Use compute_dtype=jnp.float32 for
    an exact-precision run.
    """
    if out_dtype is None:
        out_dtype = compute_dtype

    # --- flatten_inputs (glue, sorted key order as in the torch module) ---
    batch = next(iter(inputs.values())).shape[0]
    flat_input = jnp.concatenate(
        [inputs[k].reshape(batch, -1) for k in sorted(input_shapes)], axis=-1
    ).astype(jnp.float32)

    w1, b1, w2, b2, w3, b3 = params
    d_in = flat_input.shape[1]
    h2 = w2.shape[1]
    flat_out = w3.shape[1]
    w_itemsize = jnp.dtype(compute_dtype).itemsize
    out_itemsize = jnp.dtype(out_dtype).itemsize

    # --- batch padding: fill all 8 f32 sublanes / MXU rows ---
    b_pad = _round_up(max(batch, 8), 8)
    if b_pad != batch:
        flat_input = jnp.pad(flat_input, ((0, b_pad - batch), (0, 0)))
    # Duplicate along lanes -> kernel builds the cos|sin encoding in-register.
    x2 = jnp.concatenate([flat_input, flat_input], axis=-1)       # (Bp, 2*Din)

    # --- generation-aware streamed-tile choice (MB-scale, lane-dense) ---
    cfg = _generation_config()
    tn, n_pad = _choose_tiles(flat_out, h2, w_itemsize, out_itemsize, b_pad,
                              cfg["stream_budget"], cfg["min_tiles"])

    w3p = jnp.pad(w3, ((0, 0), (0, n_pad - flat_out))).astype(compute_dtype)
    b3p = jnp.pad(b3, (0, n_pad - flat_out))[None, :].astype(jnp.float32)

    w1c = w1.astype(compute_dtype)
    w2c = w2.astype(compute_dtype)
    b1r = b1[None, :].astype(jnp.float32)
    b2r = b2[None, :].astype(jnp.float32)

    # --- exact VMEM budget ---
    # Resident (constant-index) inputs are double-buffered by the BlockSpec
    # pipeline; streamed w3/b3/out tiles are double-buffered; headroom covers
    # kernel temporaries (enc/h in f32) and Mosaic internal scratch.
    fixed_bytes = (x2.size * 4 + w1c.size * w_itemsize + w2c.size * w_itemsize
                   + b1r.size * 4 + b2r.size * 4)
    stream_bytes = 2 * (h2 * tn * w_itemsize + tn * 4 + b_pad * tn * out_itemsize)
    headroom = 4 << 20
    vmem_limit = int(min(cfg["vmem_cap"],
                         max(32 << 20, 2 * fixed_bytes + stream_bytes + headroom)))

    def resident_spec(shape):
        # Constant block index: fetched once, stays VMEM-resident across all
        # output tiles (no re-DMA).
        return pl.BlockSpec(shape, lambda j: (0,) * len(shape))

    grid = (n_pad // tn,)
    flat_output = pl.pallas_call(
        functools.partial(_hypernet_kernel, d_in),
        out_shape=jax.ShapeDtypeStruct((b_pad, n_pad), out_dtype),
        grid=grid,
        in_specs=[
            resident_spec(x2.shape),
            resident_spec(w1c.shape),
            resident_spec(b1r.shape),
            resident_spec(w2c.shape),
            resident_spec(b2r.shape),
            pl.BlockSpec((h2, tn), lambda j: (0, j)),   # streamed w3 tile
            pl.BlockSpec((1, tn), lambda j: (0, j)),    # streamed b3 tile
        ],
        out_specs=pl.BlockSpec((b_pad, tn), lambda j: (0, j)),
        compiler_params=pltpu.CompilerParams(
            dimension_semantics=("parallel",),  # shard N tiles over TCs (v7x)
            vmem_limit_bytes=vmem_limit),
    )(x2, w1c, b1r, w2c, b2r, w3p, b3p)

    # Strip batch / lane padding, upcast to module output precision.
    flat_output = flat_output[:batch, :flat_out].astype(jnp.float32)

    # --- unflatten_output (glue) ---
    outputs = {}
    offset = 0
    for name, shape in output_shapes.items():
        size = int(np.prod(shape))
        chunk = flat_output[:, offset:offset + size]
        out_shape = (batch, *shape) if batch > 1 else shape
        outputs[name] = chunk.reshape(out_shape)
        offset += size
    return outputs


def _kaiming_std(fan, slope=0.01):
    gain = math.sqrt(2.0 / (1.0 + slope * slope))
    return gain / math.sqrt(fan)


def init_params(key, input_shapes, output_shapes, hidden_sizes):
    """Deterministic synthetic parameter init mirroring HyperNet.__init__ shapes."""
    flat_in = sum(int(np.prod(s)) for s in input_shapes.values())
    enc_in = 2 * flat_in                                  # cos|sin multiplier
    flat_out = sum(int(np.prod(s)) for s in output_shapes.values())

    sizes = [enc_in] + list(hidden_sizes) + [flat_out]
    keys = jax.random.split(key, len(sizes))
    params = []
    for li in range(len(sizes) - 1):
        fan_in, fan_out = sizes[li], sizes[li + 1]
        # kaiming_normal_fanout-style std (synthetic, deterministic)
        w = jax.random.normal(keys[li], (fan_in, fan_out),
                              dtype=jnp.float32) * _kaiming_std(fan_out)
        b = jnp.zeros((fan_out,), dtype=jnp.float32)
        params += [w, b]

    # init_independent_weights: last-layer bias holds flattened "independent"
    # weights — kaiming_normal for "*.weight" entries, zeros for "*.bias".
    chunks = []
    for i, (name, shape) in enumerate(output_shapes.items()):
        size = int(np.prod(shape))
        if name.endswith(".weight"):
            fan_in = shape[1] if len(shape) > 1 else 1
            chunk = jax.random.normal(
                jax.random.fold_in(key, 1000 + i), (size,),
                dtype=jnp.float32) * _kaiming_std(fan_in)
        else:  # "*.bias" -> init_bias = 0.0
            chunk = jnp.zeros((size,), dtype=jnp.float32)
        chunks.append(chunk)
    params[-1] = jnp.concatenate(chunks)
    return tuple(params)


def reference_forward(inputs, params, input_shapes, output_shapes):
    """Pure-JAX f32 reference for correctness check."""
    batch = next(iter(inputs.values())).shape[0]
    x = jnp.concatenate(
        [inputs[k].reshape(batch, -1) for k in sorted(input_shapes)], axis=-1
    ).astype(jnp.float32)
    w1, b1, w2, b2, w3, b3 = params
    enc = jnp.concatenate([jnp.cos(x), jnp.sin(x)], axis=-1)
    h = enc @ w1 + b1
    h = jnp.where(h >= 0, h, 0.01 * h)
    h = h @ w2 + b2
    h = jnp.where(h >= 0, h, 0.01 * h)
    flat = h @ w3 + b3
    outputs, offset = {}, 0
    for name, shape in output_shapes.items():
        size = int(np.prod(shape))
        out_shape = (batch, *shape) if batch > 1 else shape
        outputs[name] = flat[:, offset:offset + size].reshape(out_shape)
        offset += size
    return outputs


def _run_case(key, input_shapes, output_shapes, hidden_sizes, batch):
    k_params, *k_inputs = jax.random.split(key, 1 + len(input_shapes))
    params = init_params(k_params, input_shapes, output_shapes, hidden_sizes)
    inputs = {
        name: jax.random.normal(k_inputs[i], (batch, *shape), jnp.float32)
        for i, (name, shape) in enumerate(sorted(input_shapes.items()))
    }
    ref = reference_forward(inputs, params, input_shapes, output_shapes)

    # Exact-precision run (f32 operands & writeback) — tight tolerance.
    out_f32 = hypernet_forward(inputs, params, input_shapes, output_shapes,
                               compute_dtype=jnp.float32)
    out_f32 = jax.block_until_ready(out_f32)
    for name in output_shapes:
        assert out_f32[name].shape == ref[name].shape, name
        np.testing.assert_allclose(np.asarray(out_f32[name]),
                                   np.asarray(ref[name]),
                                   rtol=1e-5, atol=1e-5)

    # Fast run (bf16 operands + bf16 writeback, f32 accumulation).
    out_bf16 = hypernet_forward(inputs, params, input_shapes, output_shapes,
                                compute_dtype=jnp.bfloat16)
    out_bf16 = jax.block_until_ready(out_bf16)
    for name in output_shapes:
        assert out_bf16[name].shape == ref[name].shape, name
        np.testing.assert_allclose(np.asarray(out_bf16[name]),
                                   np.asarray(ref[name]),
                                   rtol=5e-2, atol=5e-2)


if __name__ == "__main__":
    key = jax.random.PRNGKey(0)
    k1, k2 = jax.random.split(key)

    # Case 1: tiny flat output (single output tile).
    _run_case(
        k1,
        input_shapes={"a": (4,), "b": (2, 3)},                       # flat_in = 10
        output_shapes={"layer.weight": (8, 4), "layer.bias": (8,)},  # flat_out = 40
        hidden_sizes=[32, 32],
        batch=2,
    )

    # Case 2: larger flat output -> multi-tile grid / padding-waste path.
    _run_case(
        k2,
        input_shapes={"a": (4,), "b": (2, 3)},                       # flat_in = 10
        output_shapes={"fc.weight": (64, 16), "fc.bias": (64,)},     # flat_out = 1088
        hidden_sizes=[32, 32],
        batch=2,
    )

    print("KERNEL_OK")
</pallas_src>

<mosaic_0001>
module attributes {stable_mosaic.version = 11 : i64} {
  func.func @_hypernet_kernel(%arg0: i32, %arg1: memref<8x20xf32, #tpu.memory_space<vmem>>, %arg2: memref<20x32xf32, #tpu.memory_space<vmem>>, %arg3: memref<1x32xf32, #tpu.memory_space<vmem>>, %arg4: memref<32x32xf32, #tpu.memory_space<vmem>>, %arg5: memref<1x32xf32, #tpu.memory_space<vmem>>, %arg6: memref<32x128xf32, #tpu.memory_space<vmem>>, %arg7: memref<1x128xf32, #tpu.memory_space<vmem>>, %arg8: memref<8x128xf32, #tpu.memory_space<vmem>>) attributes {dimension_semantics = [#tpu.dimension_semantics<parallel>], iteration_bounds = array<i64: 1>, scalar_prefetch = 0 : i64, scratch_operands = 0 : i64, tpu.core_type = #tpu.core_type<tc>, window_params = [{pipeline_mode = #tpu.pipeline_mode<synchronous>, transform_indices = @transform_0, window_bounds = array<i64: 8, 20>}, {pipeline_mode = #tpu.pipeline_mode<synchronous>, transform_indices = @transform_1, window_bounds = array<i64: 20, 32>}, {pipeline_mode = #tpu.pipeline_mode<synchronous>, transform_indices = @transform_2, window_bounds = array<i64: 1, 32>}, {pipeline_mode = #tpu.pipeline_mode<synchronous>, transform_indices = @transform_3, window_bounds = array<i64: 32, 32>}, {pipeline_mode = #tpu.pipeline_mode<synchronous>, transform_indices = @transform_4, window_bounds = array<i64: 1, 32>}, {transform_indices = @transform_5, window_bounds = array<i64: 32, 128>}, {transform_indices = @transform_6, window_bounds = array<i64: 1, 128>}, {transform_indices = @transform_7, window_bounds = array<i64: 8, 128>}]} {
    %c0 = arith.constant 0 : index
    %c0_0 = arith.constant 0 : index
    %0 = vector.load %arg1[%c0, %c0_0] : memref<8x20xf32, #tpu.memory_space<vmem>>, vector<8x20xf32>
    %1 = tpu.iota {dimensions = array<i32: 1>} : vector<8x20xi32>
    %c10_i32 = arith.constant 10 : i32
    %2 = vector.broadcast %c10_i32 : i32 to vector<8x20xi32>
    %3 = arith.cmpi slt, %1, %2 : vector<8x20xi32>
    %4 = math.cos %0 : vector<8x20xf32>
    %5 = math.sin %0 : vector<8x20xf32>
    %6 = arith.select %3, %4, %5 : vector<8x20xi1>, vector<8x20xf32>
    %c0_1 = arith.constant 0 : index
    %c0_2 = arith.constant 0 : index
    %7 = vector.load %arg2[%c0_1, %c0_2] : memref<20x32xf32, #tpu.memory_space<vmem>>, vector<20x32xf32>
    %cst = arith.constant dense<0.000000e+00> : vector<8x32xf32>
    %8 = tpu.matmul %6, %7, %cst {dimension_numbers = #tpu.dot_dimension_numbers<[1], [0], [0], [1], [0, 0, 1, 1], [], []>} : vector<8x20xf32>, vector<20x32xf32>, vector<8x32xf32> -> vector<8x32xf32>
    %c0_3 = arith.constant 0 : index
    %c0_4 = arith.constant 0 : index
    %9 = vector.load %arg3[%c0_3, %c0_4] : memref<1x32xf32, #tpu.memory_space<vmem>>, vector<1x32xf32>
    %10 = vector.broadcast %9 : vector<1x32xf32> to vector<8x32xf32>
    %11 = arith.addf %8, %10 : vector<8x32xf32>
    %cst_5 = arith.constant 0.000000e+00 : f32
    %12 = vector.broadcast %cst_5 : f32 to vector<8x32xf32>
    %13 = arith.cmpf oge, %11, %12 : vector<8x32xf32>
    %cst_6 = arith.constant 0.00999999977 : f32
    %14 = vector.broadcast %cst_6 : f32 to vector<8x32xf32>
    %15 = arith.mulf %14, %11 : vector<8x32xf32>
    %16 = arith.select %13, %11, %15 : vector<8x32xi1>, vector<8x32xf32>
    %c0_7 = arith.constant 0 : index
    %c0_8 = arith.constant 0 : index
    %17 = vector.load %arg4[%c0_7, %c0_8] : memref<32x32xf32, #tpu.memory_space<vmem>>, vector<32x32xf32>
    %cst_9 = arith.constant dense<0.000000e+00> : vector<8x32xf32>
    %18 = tpu.matmul %16, %17, %cst_9 {dimension_numbers = #tpu.dot_dimension_numbers<[1], [0], [0], [1], [0, 0, 1, 1], [], []>} : vector<8x32xf32>, vector<32x32xf32>, vector<8x32xf32> -> vector<8x32xf32>
    %c0_10 = arith.constant 0 : index
    %c0_11 = arith.constant 0 : index
    %19 = vector.load %arg5[%c0_10, %c0_11] : memref<1x32xf32, #tpu.memory_space<vmem>>, vector<1x32xf32>
    %20 = vector.broadcast %19 : vector<1x32xf32> to vector<8x32xf32>
    %21 = arith.addf %18, %20 : vector<8x32xf32>
    %cst_12 = arith.constant 0.000000e+00 : f32
    %22 = vector.broadcast %cst_12 : f32 to vector<8x32xf32>
    %23 = arith.cmpf oge, %21, %22 : vector<8x32xf32>
    %cst_13 = arith.constant 0.00999999977 : f32
    %24 = vector.broadcast %cst_13 : f32 to vector<8x32xf32>
    %25 = arith.mulf %24, %21 : vector<8x32xf32>
    %26 = arith.select %23, %21, %25 : vector<8x32xi1>, vector<8x32xf32>
    %c0_14 = arith.constant 0 : index
    %c0_15 = arith.constant 0 : index
    %27 = vector.load %arg6[%c0_14, %c0_15] : memref<32x128xf32, #tpu.memory_space<vmem>>, vector<32x128xf32>
    %cst_16 = arith.constant dense<0.000000e+00> : vector<8x128xf32>
    %28 = tpu.matmul %26, %27, %cst_16 {dimension_numbers = #tpu.dot_dimension_numbers<[1], [0], [0], [1], [0, 0, 1, 1], [], []>} : vector<8x32xf32>, vector<32x128xf32>, vector<8x128xf32> -> vector<8x128xf32>
    %c0_17 = arith.constant 0 : index
    %c0_18 = arith.constant 0 : index
    %29 = vector.load %arg7[%c0_17, %c0_18] : memref<1x128xf32, #tpu.memory_space<vmem>>, vector<1x128xf32>
    %30 = vector.broadcast %29 : vector<1x128xf32> to vector<8x128xf32>
    %31 = arith.addf %28, %30 : vector<8x128xf32>
    %c0_19 = arith.constant 0 : index
    %c0_20 = arith.constant 0 : index
    %32 = vector.load %arg8[%c0_19, %c0_20] : memref<8x128xf32, #tpu.memory_space<vmem>>, vector<8x128xf32>
    tpu.vector_store %arg8[%c0_19, %c0_20], %31 {strides = array<i32>} : memref<8x128xf32, #tpu.memory_space<vmem>>, vector<8x128xf32>,
    return
  }
  func.func @transform_0(%arg0: i32) -> (i32, i32) {
    %c0_i32 = arith.constant 0 : i32
    %c0_i32_0 = arith.constant 0 : i32
    %c0_i32_1 = arith.constant 0 : i32
    return %c0_i32, %c0_i32_0 : i32, i32
  }
  func.func @transform_1(%arg0: i32) -> (i32, i32) {
    %c0_i32 = arith.constant 0 : i32
    %c0_i32_0 = arith.constant 0 : i32
    %c0_i32_1 = arith.constant 0 : i32
    return %c0_i32, %c0_i32_0 : i32, i32
  }
  func.func @transform_2(%arg0: i32) -> (i32, i32) {
    %c0_i32 = arith.constant 0 : i32
    %c0_i32_0 = arith.constant 0 : i32
    %c0_i32_1 = arith.constant 0 : i32
    return %c0_i32, %c0_i32_0 : i32, i32
  }
  func.func @transform_3(%arg0: i32) -> (i32, i32) {
    %c0_i32 = arith.constant 0 : i32
    %c0_i32_0 = arith.constant 0 : i32
    %c0_i32_1 = arith.constant 0 : i32
    return %c0_i32, %c0_i32_0 : i32, i32
  }
  func.func @transform_4(%arg0: i32) -> (i32, i32) {
    %c0_i32 = arith.constant 0 : i32
    %c0_i32_0 = arith.constant 0 : i32
    %c0_i32_1 = arith.constant 0 : i32
    return %c0_i32, %c0_i32_0 : i32, i32
  }
  func.func @transform_5(%arg0: i32) -> (i32, i32) {
    %c0_i32 = arith.constant 0 : i32
    %c0_i32_0 = arith.constant 0 : i32
    return %c0_i32, %arg0 : i32, i32
  }
  func.func @transform_6(%arg0: i32) -> (i32, i32) {
    %c0_i32 = arith.constant 0 : i32
    %c0_i32_0 = arith.constant 0 : i32
    return %c0_i32, %arg0 : i32, i32
  }
  func.func @transform_7(%arg0: i32) -> (i32, i32) {
    %c0_i32 = arith.constant 0 : i32
    %c0_i32_0 = arith.constant 0 : i32
    return %c0_i32, %arg0 : i32, i32
  }
}

</mosaic_0001>

<llo_original>
// kernel: tpu_custom_call.1
$region0: #{tpu_custom_call.1}
  #allocation0 [shape = 'u32[]', space=smem, size = 0x4, offset = 0x4, fixed_abs, tag = 'smem constant byte address 0x4 - core index']
  #allocation1 [shape = 'u32[144,128]{1,0:T(1,128)}', space=vmem, size = 0x12000, scoped, tag = 'internal scratch']
  %s0 = inlined_call_operand.hbm [shape: f32[8,20], index: 0, kind: input, shape index: {}]
  %s1 = inlined_call_operand.hbm [shape: f32[20,32], index: 1, kind: input, shape index: {}]
  %s2 = inlined_call_operand.vmem [shape: f32[1,32], index: 2, kind: input, shape index: {}]
  %s3 = inlined_call_operand.hbm [shape: f32[32,32], index: 3, kind: input, shape index: {}]
  %s4 = inlined_call_operand.vmem [shape: f32[1,32], index: 4, kind: input, shape index: {}]
  %s5 = inlined_call_operand.hbm [shape: f32[32,128], index: 5, kind: input, shape index: {}]
  %s6 = inlined_call_operand.vmem [shape: f32[1,128], index: 6, kind: input, shape index: {}]
  %s7 = inlined_call_operand.hbm [shape: f32[8,128], index: 7, kind: output, shape index: {}]
  %s8 = sld [smem:[#allocation0]]
  $region54: #{tpu_custom_call.1} parent=0
    _
  %s10 = ssub.s32 1, %s8
  %s11 = scalar_select 0, %s10, %s8
  $region1: #{tpu_custom_call.1} parent=0
    #allocation2 [shape = 'u8[4096]{0}', space=vmem, size = 0x1000, scoped, tag = 'input window, operand 0, single buffered']
    #allocation3 [shape = 's32[1]{0}', space=sflag, size = 0x4, scoped, tag = 'scoped memory for tpu_custom_call.1']
    #allocation4 [shape = 's32[1]{0}', space=sflag, size = 0x4, scoped, tag = 'scoped memory for tpu_custom_call.1']
    #allocation5 [shape = 'u8[12288]{0}', space=vmem, size = 0x3000, scoped, tag = 'input window, operand 1, single buffered']
    #allocation6 [shape = 's32[1]{0}', space=sflag, size = 0x4, scoped, tag = 'scoped memory for tpu_custom_call.1']
    #allocation7 [shape = 'u8[16384]{0}', space=vmem, size = 0x4000, scoped, tag = 'input window, operand 3, single buffered']
    #allocation8 [shape = 'u8[16384]{0}', space=vmem, size = 0x4000, scoped, tag = 'input window, operand 5, single buffered']
    #allocation9 [shape = 's32[1]{0}', space=sflag, size = 0x4, scoped, tag = 'scoped memory for tpu_custom_call.1']
    #allocation10 [shape = 'u8[4096]{0}', space=vmem, size = 0x1000, scoped, tag = 'output window, operand 0, single buffered']
    %12 = vsyncpa [#allocation3], 0
    %13 = vsyncpa [#allocation6], 0
    %14 = vsyncpa [#allocation9], 0
    %15 = vsyncpa [#allocation4], 0
    // Predicated region
    $region2: #{tpu_custom_call.1} parent=1 // pred_check
      _
    $region3: #{tpu_custom_call.1} parent=1 // pred_check_branch
      %17 = sbr.rel (0) target = $region5
    $region4: #{tpu_custom_call.1} parent=1 // pred_region
      %s19 = ssub.s32 128, 128
      %20 = vsyncadd [#allocation3], %s19
      %s22 = sshll.u32 [#allocation2], 4
      %s23 = int_to_ptr.vmem [resolvable:$true] %s22
      %25 = dma.hbm_to_vmem [thread:$0]  %s0, 128, %s23, [#allocation3]
    $region5: #{tpu_custom_call.1} parent=1 // pred_fallthru
      _
    // Predicated region
    $region6: #{tpu_custom_call.1} parent=1 // pred_check
      _
    $region7: #{tpu_custom_call.1} parent=1 // pred_check_branch
      %27 = sbr.rel (0) target = $region9
    $region8: #{tpu_custom_call.1} parent=1 // pred_region
      %s29 = ssub.s32 384, 384
      %30 = vsyncadd [#allocation6], %s29
      %s31 = sshll.u32 [#allocation5], 4
      %s32 = int_to_ptr.vmem [resolvable:$true] %s31
      %37 = dma.hbm_to_vmem [thread:$0]  %s1, 384, %s32, [#allocation6], 128, 128, 8
    $region9: #{tpu_custom_call.1} parent=1 // pred_fallthru
      _
    // Predicated region
    $region10: #{tpu_custom_call.1} parent=1 // pred_check
      _
    $region11: #{tpu_custom_call.1} parent=1 // pred_check_branch
      %39 = sbr.rel (0) target = $region13
    $region12: #{tpu_custom_call.1} parent=1 // pred_region
      _
    $region13: #{tpu_custom_call.1} parent=1 // pred_fallthru
      _
    // Predicated region
    $region14: #{tpu_custom_call.1} parent=1 // pred_check
      _
    $region15: #{tpu_custom_call.1} parent=1 // pred_check_branch
      %41 = sbr.rel (0) target = $region17
    $region16: #{tpu_custom_call.1} parent=1 // pred_region
      %s43 = ssub.s32 512, 512
      %44 = vsyncadd [#allocation6], %s43
      %s45 = sshll.u32 [#allocation7], 4
      %s46 = int_to_ptr.vmem [resolvable:$true] %s45
      %51 = dma.hbm_to_vmem [thread:$0]  %s3, 512, %s46, [#allocation6], 128, 128, 8
    $region17: #{tpu_custom_call.1} parent=1 // pred_fallthru
      _
    // Predicated region
    $region18: #{tpu_custom_call.1} parent=1 // pred_check
      _
    $region19: #{tpu_custom_call.1} parent=1 // pred_check_branch
      %53 = sbr.rel (0) target = $region21
    $region20: #{tpu_custom_call.1} parent=1 // pred_region
      _
    $region21: #{tpu_custom_call.1} parent=1 // pred_fallthru
      _
    // Predicated region
    $region22: #{tpu_custom_call.1} parent=1 // pred_check
      _
    $region23: #{tpu_custom_call.1} parent=1 // pred_check_branch
      %55 = sbr.rel (0) target = $region25
    $region24: #{tpu_custom_call.1} parent=1 // pred_region
      %s57 = ssub.s32 512, 512
      %58 = vsyncadd [#allocation9], %s57
      %s59 = sshll.u32 [#allocation8], 4
      %s60 = int_to_ptr.vmem [resolvable:$true] %s59
      %65 = dma.hbm_to_vmem [thread:$0]  %s5, 512, %s60, [#allocation9], 128, 128, 8
    $region25: #{tpu_custom_call.1} parent=1 // pred_fallthru
      _
    // Predicated region
    $region26: #{tpu_custom_call.1} parent=1 // pred_check
      _
    $region27: #{tpu_custom_call.1} parent=1 // pred_check_branch
      %67 = sbr.rel (0) target = $region29
    $region28: #{tpu_custom_call.1} parent=1 // pred_region
      _
    $region29: #{tpu_custom_call.1} parent=1 // pred_fallthru
      _
    // Predicated region
    $region30: #{tpu_custom_call.1} parent=1 // pred_check
      _
    $region31: #{tpu_custom_call.1} parent=1 // pred_check_branch
      %69 = sbr.rel (0) target = $region33
    $region32: #{tpu_custom_call.1} parent=1 // pred_region
      %70 = dma.done [#allocation3], 128
    $region33: #{tpu_custom_call.1} parent=1 // pred_fallthru
      _
    // Predicated region
    $region34: #{tpu_custom_call.1} parent=1 // pred_check
      _
    $region35: #{tpu_custom_call.1} parent=1 // pred_check_branch
      %72 = sbr.rel (0) target = $region37
    $region36: #{tpu_custom_call.1} parent=1 // pred_region
      %73 = dma.done [#allocation6], 384
    $region37: #{tpu_custom_call.1} parent=1 // pred_fallthru
      _
    // Predicated region
    $region38: #{tpu_custom_call.1} parent=1 // pred_check
      _
    $region39: #{tpu_custom_call.1} parent=1 // pred_check_branch
      %75 = sbr.rel (0) target = $region41
    $region40: #{tpu_custom_call.1} parent=1 // pred_region
      %76 = dma.done [#allocation6], 512
    $region41: #{tpu_custom_call.1} parent=1 // pred_fallthru
      _
    // Predicated region
    $region42: #{tpu_custom_call.1} parent=1 // pred_check
      _
    $region43: #{tpu_custom_call.1} parent=1 // pred_check_branch
      %78 = sbr.rel (0) target = $region45
    $region44: #{tpu_custom_call.1} parent=1 // pred_region
      %79 = dma.done [#allocation9], 512
    $region45: #{tpu_custom_call.1} parent=1 // pred_fallthru
      _
    %v80 = vld [vmem:[#allocation2] sm:$0xff]
    %v81 = vlaneseq
    %v82 = vand.u32 %v81, 127
    %vm83 = vcmp.lt.s32.totalorder %v82, 10
    %v84 = vand.u32 2147483647, %v80
    %vm85 = vcmp.le.f32.partialorder %v84, 0.7853982
    %vm86 = vcmp.lt.s32.totalorder %v80, 0
    %v87 = vand.u32 %v80, 2139095040
    %v88 = vshrl.u32 %v87, 23
    %v89 = vsub.s32 %v88, 127
    %v90 = vand.u32 2147483647, %v80
    %v91 = vand.u32 %v90, 8388607
    %v92 = vor.u32 %v91, 8388608
    %v93 = vsub.s32 0, %v92
    %v94 = vadd.s32 %v89, 1
    %vm95 = vcmp.gt.s32.totalorder %v94, 0
    %v96 = vsel %vm95, %v94, 0
    %v97 = vshrl.u32 %v96, 5
    %v98 = vand.u32 %v96, 31
    %v99 = vsub.s32 32, %v98
    %v100 = vshrl.u32 683565275, %v99
    %v101 = vshll.u32 683565275, %v98
    %v102 = vshrl.u32 2475754826, %v99
    %v103 = vor.u32 %v101, %v102
    %v104 = vshll.u32 2475754826, %v98
    %v105 = vshrl.u32 2131351028, %v99
    %v106 = vor.u32 %v104, %v105
    %v107 = vshll.u32 2131351028, %v98
    %v108 = vshrl.u32 2102212464, %v99
    %v109 = vor.u32 %v107, %v108
    %v110 = vshll.u32 2102212464, %v98
    %v111 = vshrl.u32 920167782, %v99
    %v112 = vor.u32 %v110, %v111
    %v113 = vshll.u32 920167782, %v98
    %v114 = vshrl.u32 1326507024, %v99
    %v115 = vor.u32 %v113, %v114
    %vm116 = vcmp.lt.s32.totalorder %v97, 1
    %vm117 = vcmp.lt.s32.totalorder %v97, 2
    %vm118 = vcmp.lt.s32.totalorder %v97, 3
    %vm119 = vcmp.lt.s32.totalorder %v97, 4
    %v120 = vsel %vm116, %v100, %v103
    %v121 = vsel %vm119, %v109, 2102212464
    %v122 = vsel %vm118, %v106, %v121
    %v123 = vsel %vm117, %v120, %v122
    %v124 = vsel %vm116, %v103, %v106
    %v125 = vsel %vm119, %v112, 920167782
    %v126 = vsel %vm118, %v109, %v125
    %v127 = vsel %vm117, %v124, %v126
    %v128 = vsel %vm116, %v106, %v109
    %v129 = vsel %vm119, %v115, 1326507024
    %v130 = vsel %vm118, %v112, %v129
    %v131 = vsel %vm117, %v128, %v130
    %v132 = vshll.u32 %v92, 8
    %v133 = vmul.u32.u64.compose %v132, %v131
    %v134 = vextract.low.u32 %v133
    %v135 = vextract.high.u32 %v133
    %v136 = vmul.u32.u64.compose %v132, %v127
    %v137 = vextract.low.u32 %v136
    %v138 = vextract.high.u32 %v136
    %v139 = vmul.u32 %v132, %v123
    %v140 = vadd.s32 %v135, %v137
    %vm141 = vc.u32 %v135, %v137
    %v142 = vadd.s32 %v138, 1
    %v143 = vsel %vm141, %v142, %v138
    %v144 = vadd.s32 %v139, %v143
    %v145 = vadd.s32 %v144, 536870912
    %v146 = vshrl.u32 %v145, 30
    %v147 = vshll.u32 %v146, 30
    %v148 = vsub.s32 %v144, %v147
    %vm149 = vcmp.lt.s32.totalorder %v148, 0
    %v150 = vsub.s32 0, %v148
    %v151 = vsel %vm149, %v150, %v148
    %v152 = vclz %v151
    %v153 = vsub.s32 %v152, 2
    %vm154 = vcmp.gt.s32.totalorder 0, %v153
    %v155 = vsel %vm154, 0, %v153
    %v156 = vsub.s32 32, %v155
    %v157 = vshll.u32 %v148, %v155
    %v158 = vshrl.u32 %v140, %v156
    %v159 = vor.u32 %v157, %v158
    %v160 = vsub.s32 4294967266, %v155
    %v161 = vadd.s32 %v160, 127
    %v162 = vshll.u32 %v161, 23
    %v163 = vor.u32 4788187, %v162
    %v164 = vand.u32 2147483647, %v163
    %v166 = vcvt.s32.f32 %v159
    %v167 = vmul.f32 %v166, %v164
    %v168 = vxor.u32 %v167, 2147483648
    %v169 = vsel %vm86, %v168, %v167
    %v170 = vsub.s32 4, %v146
    %v171 = vsel %vm86, %v170, %v146
    %v172 = vsel %vm85, %v80, %v169
    %v173 = vsel %vm85, 0, %v171
    %v174 = vcosq.f32.pop %v172
    %v175 = vsinq.f32.pop %v172
    %vm176 = vweird.f32 %v80
    %v177 = vand.u32 %v173, 3
    %vm178 = vcmp.lt.s32.totalorder %v177, 2
    %vm179 = vcmp.eq.s32.totalorder %v177, 0
    %v180 = vxor.u32 %v175, 2147483648
    %v181 = vsel %vm179, %v174, %v180
    %vm182 = vcmp.eq.s32.totalorder %v177, 2
    %v183 = vxor.u32 %v174, 2147483648
    %v184 = vsel %vm182, %v183, %v175
    %v185 = vsel %vm178, %v181, %v184
    %v186 = vsel %vm176, nan, %v185
    %v187 = vand.u32 2147483647, %v80
    %vm188 = vcmp.le.f32.partialorder %v187, 0.7853982
    %vm189 = vcmp.lt.s32.totalorder %v80, 0
    %v190 = vand.u32 %v80, 2139095040
    %v191 = vshrl.u32 %v190, 23
    %v192 = vsub.s32 %v191, 127
    %v193 = vand.u32 2147483647, %v80
    %v194 = vand.u32 %v193, 8388607
    %v195 = vor.u32 %v194, 8388608
    %v196 = vsub.s32 0, %v195
    %v197 = vadd.s32 %v192, 1
    %vm198 = vcmp.gt.s32.totalorder %v197, 0
    %v199 = vsel %vm198, %v197, 0
    %v200 = vshrl.u32 %v199, 5
    %v201 = vand.u32 %v199, 31
    %v202 = vsub.s32 32, %v201
    %v203 = vshrl.u32 683565275, %v202
    %v204 = vshll.u32 683565275, %v201
    %v205 = vshrl.u32 2475754826, %v202
    %v206 = vor.u32 %v204, %v205
    %v207 = vshll.u32 2475754826, %v201
    %v208 = vshrl.u32 2131351028, %v202
    %v209 = vor.u32 %v207, %v208
    %v210 = vshll.u32 2131351028, %v201
    %v211 = vshrl.u32 2102212464, %v202
    %v212 = vor.u32 %v210, %v211
    %v213 = vshll.u32 2102212464, %v201
    %v214 = vshrl.u32 920167782, %v202
    %v215 = vor.u32 %v213, %v214
    %v216 = vshll.u32 920167782, %v201
    %v217 = vshrl.u32 1326507024, %v202
    %v218 = vor.u32 %v216, %v217
    %vm219 = vcmp.lt.s32.totalorder %v200, 1
    %vm220 = vcmp.lt.s32.totalorder %v200, 2
    %vm221 = vcmp.lt.s32.totalorder %v200, 3
    %vm222 = vcmp.lt.s32.totalorder %v200, 4
    %v223 = vsel %vm219, %v203, %v206
    %v224 = vsel %vm222, %v212, 2102212464
    %v225 = vsel %vm221, %v209, %v224
    %v226 = vsel %vm220, %v223, %v225
    %v227 = vsel %vm219, %v206, %v209
    %v228 = vsel %vm222, %v215, 920167782
    %v229 = vsel %vm221, %v212, %v228
    %v230 = vsel %vm220, %v227, %v229
    %v231 = vsel %vm219, %v209, %v212
    %v232 = vsel %vm222, %v218, 1326507024
    %v233 = vsel %vm221, %v215, %v232
    %v234 = vsel %vm220, %v231, %v233
    %v235 = vshll.u32 %v195, 8
    %v236 = vmul.u32.u64.compose %v235, %v234
    %v237 = vextract.low.u32 %v236
    %v238 = vextract.high.u32 %v236
    %v239 = vmul.u32.u64.compose %v235, %v230
    %v240 = vextract.low.u32 %v239
    %v241 = vextract.high.u32 %v239
    %v242 = vmul.u32 %v235, %v226
    %v243 = vadd.s32 %v238, %v240
    %vm244 = vc.u32 %v238, %v240
    %v245 = vadd.s32 %v241, 1
    %v246 = vsel %vm244, %v245, %v241
    %v247 = vadd.s32 %v242, %v246
    %v248 = vadd.s32 %v247, 536870912
    %v249 = vshrl.u32 %v248, 30
    %v250 = vshll.u32 %v249, 30
    %v251 = vsub.s32 %v247, %v250
    %vm252 = vcmp.lt.s32.totalorder %v251, 0
    %v253 = vsub.s32 0, %v251
    %v254 = vsel %vm252, %v253, %v251
    %v255 = vclz %v254
    %v256 = vsub.s32 %v255, 2
    %vm257 = vcmp.gt.s32.totalorder 0, %v256
    %v258 = vsel %vm257, 0, %v256
    %v259 = vsub.s32 32, %v258
    %v260 = vshll.u32 %v251, %v258
    %v261 = vshrl.u32 %v243, %v259
    %v262 = vor.u32 %v260, %v261
    %v263 = vsub.s32 4294967266, %v258
    %v264 = vadd.s32 %v263, 127
    %v265 = vshll.u32 %v264, 23
    %v266 = vor.u32 4788187, %v265
    %v267 = vand.u32 2147483647, %v266
    %v269 = vcvt.s32.f32 %v262
    %v270 = vmul.f32 %v269, %v267
    %v271 = vxor.u32 %v270, 2147483648
    %v272 = vsel %vm189, %v271, %v270
    %v273 = vsub.s32 4, %v249
    %v274 = vsel %vm189, %v273, %v249
    %v275 = vsel %vm188, %v80, %v272
    %v276 = vsel %vm188, 0, %v274
    %v277 = vcosq.f32.pop %v275
    %v278 = vsinq.f32.pop %v275
    %vm279 = vweird.f32 %v80
    %v280 = vadd.s32 %v276, 3
    %v281 = vand.u32 %v280, 3
    %vm282 = vcmp.lt.s32.totalorder %v281, 2
    %vm283 = vcmp.eq.s32.totalorder %v281, 0
    %v284 = vxor.u32 %v278, 2147483648
    %v285 = vsel %vm283, %v277, %v284
    %vm286 = vcmp.eq.s32.totalorder %v281, 2
    %v287 = vxor.u32 %v277, 2147483648
    %v288 = vsel %vm286, %v287, %v278
    %v289 = vsel %vm282, %v285, %v288
    %v290 = vsel %vm279, nan, %v289
    %v291 = vsel %vm83, %v186, %v290
    %v292 = vld [vmem:[#allocation5] sm:$0xff]
    %v293 = vld [vmem:[#allocation5 + $0x8] sm:$0xff]
    %v294 = vld [vmem:[#allocation5 + $0x10] sm:$0xf]
    %v295 = vld [vmem:[%s2] sm:$0x1]
    %v297 = vlaneseq
    %v298 = vshrl.u32 %v297, 7
    %v299 = vsub.s32 0, %v298
    %v300 = vrot.slane %v295, %v299
    %vm302 = vcmask 162816
    %v304 = vsel %vm302, %v291, 0
    %vm306 = vcmask 1043456
    %v308 = vsel %vm306, %v294, 0
    %310 = vmatprep.subr.mxu0 0.0
    %311 = vmatpush1.msra.mxu0 %v292
    %312 = vmatprep.subr.mxu0 0.0
    %313 = vmatpush1.msra.mxu0 %v293
    %314 = vmatprep.subr.mxu0 0.0
    %315 = vmatpush1.msra.mxu0 %v308
    %316 = vmatprep.subr.mxu0 0.0
    %317 = vmatpush1.msra.mxu0 0.0
    %318 = vmatprep.subr.mxu0 0.0
    %319 = vmatpush1.msra.mxu0 0.0
    %320 = vmatprep.subr.mxu0 0.0
    %321 = vmatpush1.msra.mxu0 0.0
    %322 = vmatprep.subr.mxu0 0.0
    %323 = vmatpush1.msra.mxu0 0.0
    %324 = vmatprep.subr.mxu0 0.0
    %325 = vmatpush1.msra.mxu0 0.0
    %326 = vmatprep.subr.mxu0 0.0
    %327 = vmatpush1.msra.mxu0 0.0
    %328 = vmatprep.subr.mxu0 0.0
    %329 = vmatpush1.msra.mxu0 0.0
    %330 = vmatprep.subr.mxu0 0.0
    %331 = vmatpush1.msra.mxu0 0.0
    %332 = vmatprep.subr.mxu0 0.0
    %333 = vmatpush1.msra.mxu0 0.0
    %334 = vmatprep.subr.mxu0 0.0
    %335 = vmatpush1.msra.mxu0 0.0
    %336 = vmatprep.subr.mxu0 0.0
    %337 = vmatpush1.msra.mxu0 0.0
    %338 = vmatprep.subr.mxu0 0.0
    %339 = vmatpush1.msra.mxu0 0.0
    %340 = vmatprep.subr.mxu0 0.0
    %341 = vmatpush1.msra.mxu0 0.0
    %342 = vmatprep.subr.mxu0 0.0
    %343 = vmatpush1.msra.mxu0 0.0
    %344 = vmatprep.subr.mxu0 0.0
    %345 = vmatpush1.msra.mxu0 0.0
    %346 = vmatprep.subr.mxu0 0.0
    %347 = vmatpush1.msra.mxu0 0.0
    %348 = vmatprep.subr.mxu0 0.0
    %349 = vmatpush1.msra.mxu0 0.0
    %350 = vmatprep.subr.mxu0 0.0
    %351 = vmatpush1.msra.mxu0 0.0
    %352 = vmatprep.subr.mxu0 0.0
    %353 = vmatpush1.msra.mxu0 0.0
    %354 = vmatprep.subr.mxu0 0.0
    %355 = vmatpush1.msra.mxu0 0.0
    %356 = vmatprep.subr.mxu0 0.0
    %357 = vmatpush1.msra.mxu0 0.0
    %358 = vmatprep.subr.mxu0 0.0
    %359 = vmatpush1.msra.mxu0 0.0
    %360 = vmatprep.subr.mxu0 0.0
    %361 = vmatpush1.msra.mxu0 0.0
    %362 = vmatprep.subr.mxu0 0.0
    %363 = vmatpush1.msra.mxu0 0.0
    %364 = vmatprep.subr.mxu0 0.0
    %365 = vmatpush1.msra.mxu0 0.0
    %366 = vmatprep.subr.mxu0 0.0
    %367 = vmatpush1.msra.mxu0 0.0
    %368 = vmatprep.subr.mxu0 0.0
    %369 = vmatpush1.msra.mxu0 0.0
    %370 = vmatprep.subr.mxu0 0.0
    %371 = vmatpush1.msra.mxu0 0.0
    %372 = vmatprep.subr.mxu0 0.0
    %373 = vmatpush1.msra.mxu0 0.0
    %374 = vmatprep.mubr.f32.mxu0 0.0
    %375 = vmatmul.mubr.f32.gmra.mrb[0].mxu0 %v304
    %v376 = vpop.f32.mrb[0].mxu0
    %v377 = vadd.f32 %v300, %v376
    %v378 = vpop.f32.mrb[0].mxu0
    %379 = vdwg.mxu0
    %vm380 = vcmp.ge.f32.partialorder %v377, 0.0
    %v381 = vmul.f32 %v377, 0.01
    %v382 = vsel %vm380, %v377, %v381
    %v383 = vld [vmem:[#allocation7] sm:$0xff]
    %v384 = vld [vmem:[#allocation7 + $0x8] sm:$0xff]
    %v385 = vld [vmem:[#allocation7 + $0x10] sm:$0xff]
    %v386 = vld [vmem:[#allocation7 + $0x18] sm:$0xff]
    %v387 = vld [vmem:[%s4] sm:$0x1]
    %v389 = vlaneseq
    %v390 = vshrl.u32 %v389, 7
    %v391 = vsub.s32 0, %v390
    %v392 = vrot.slane %v387, %v391
    %vm394 = vcmask 261120
    %v396 = vsel %vm394, %v382, 0
    %398 = vmatprep.subr.mxu0 0.0
    %399 = vmatpush1.msra.mxu0 %v383
    %400 = vmatprep.subr.mxu0 0.0
    %401 = vmatpush1.msra.mxu0 %v384
    %402 = vmatprep.subr.mxu0 0.0
    %403 = vmatpush1.msra.mxu0 %v385
    %404 = vmatprep.subr.mxu0 0.0
    %405 = vmatpush1.msra.mxu0 %v386
    %406 = vmatprep.subr.mxu0 0.0
    %407 = vmatpush1.msra.mxu0 0.0
    %408 = vmatprep.subr.mxu0 0.0
    %409 = vmatpush1.msra.mxu0 0.0
    %410 = vmatprep.subr.mxu0 0.0
    %411 = vmatpush1.msra.mxu0 0.0
    %412 = vmatprep.subr.mxu0 0.0
    %413 = vmatpush1.msra.mxu0 0.0
    %414 = vmatprep.subr.mxu0 0.0
    %415 = vmatpush1.msra.mxu0 0.0
    %416 = vmatprep.subr.mxu0 0.0
    %417 = vmatpush1.msra.mxu0 0.0
    %418 = vmatprep.subr.mxu0 0.0
    %419 = vmatpush1.msra.mxu0 0.0
    %420 = vmatprep.subr.mxu0 0.0
    %421 = vmatpush1.msra.mxu0 0.0
    %422 = vmatprep.subr.mxu0 0.0
    %423 = vmatpush1.msra.mxu0 0.0
    %424 = vmatprep.subr.mxu0 0.0
    %425 = vmatpush1.msra.mxu0 0.0
    %426 = vmatprep.subr.mxu0 0.0
    %427 = vmatpush1.msra.mxu0 0.0
    %428 = vmatprep.subr.mxu0 0.0
    %429 = vmatpush1.msra.mxu0 0.0
    %430 = vmatprep.subr.mxu0 0.0
    %431 = vmatpush1.msra.mxu0 0.0
    %432 = vmatprep.subr.mxu0 0.0
    %433 = vmatpush1.msra.mxu0 0.0
    %434 = vmatprep.subr.mxu0 0.0
    %435 = vmatpush1.msra.mxu0 0.0
    %436 = vmatprep.subr.mxu0 0.0
    %437 = vmatpush1.msra.mxu0 0.0
    %438 = vmatprep.subr.mxu0 0.0
    %439 = vmatpush1.msra.mxu0 0.0
    %440 = vmatprep.subr.mxu0 0.0
    %441 = vmatpush1.msra.mxu0 0.0
    %442 = vmatprep.subr.mxu0 0.0
    %443 = vmatpush1.msra.mxu0 0.0
    %444 = vmatprep.subr.mxu0 0.0
    %445 = vmatpush1.msra.mxu0 0.0
    %446 = vmatprep.subr.mxu0 0.0
    %447 = vmatpush1.msra.mxu0 0.0
    %448 = vmatprep.subr.mxu0 0.0
    %449 = vmatpush1.msra.mxu0 0.0
    %450 = vmatprep.subr.mxu0 0.0
    %451 = vmatpush1.msra.mxu0 0.0
    %452 = vmatprep.subr.mxu0 0.0
    %453 = vmatpush1.msra.mxu0 0.0
    %454 = vmatprep.subr.mxu0 0.0
    %455 = vmatpush1.msra.mxu0 0.0
    %456 = vmatprep.subr.mxu0 0.0
    %457 = vmatpush1.msra.mxu0 0.0
    %458 = vmatprep.subr.mxu0 0.0
    %459 = vmatpush1.msra.mxu0 0.0
    %460 = vmatprep.subr.mxu0 0.0
    %461 = vmatpush1.msra.mxu0 0.0
    %462 = vmatprep.mubr.f32.mxu0 0.0
    %463 = vmatmul.mubr.f32.gmra.mrb[0].mxu0 %v396
    %v464 = vpop.f32.mrb[0].mxu0
    %v465 = vadd.f32 %v392, %v464
    %v466 = vpop.f32.mrb[0].mxu0
    %467 = vdwg.mxu0
    %vm468 = vcmp.ge.f32.partialorder %v465, 0.0
    %v469 = vmul.f32 %v465, 0.01
    %v470 = vsel %vm468, %v465, %v469
    %v471 = vld [vmem:[#allocation8] sm:$0xff]
    %v472 = vld [vmem:[#allocation8 + $0x8] sm:$0xff]
    %v473 = vld [vmem:[#allocation8 + $0x10] sm:$0xff]
    %v474 = vld [vmem:[#allocation8 + $0x18] sm:$0xff]
    %v475 = vld [vmem:[%s6] sm:$0x1]
    %v477 = vlaneseq
    %v478 = vshrl.u32 %v477, 7
    %v479 = vsub.s32 0, %v478
    %v480 = vrot.slane %v475, %v479
    %v483 = vsel %vm394, %v470, 0
    %485 = vmatprep.subr.mxu0 0.0
    %486 = vmatpush1.msra.mxu0 %v471
    %487 = vmatprep.subr.mxu0 0.0
    %488 = vmatpush1.msra.mxu0 %v472
    %489 = vmatprep.subr.mxu0 0.0
    %490 = vmatpush1.msra.mxu0 %v473
    %491 = vmatprep.subr.mxu0 0.0
    %492 = vmatpush1.msra.mxu0 %v474
    %493 = vmatprep.subr.mxu0 0.0
    %494 = vmatpush1.msra.mxu0 0.0
    %495 = vmatprep.subr.mxu0 0.0
    %496 = vmatpush1.msra.mxu0 0.0
    %497 = vmatprep.subr.mxu0 0.0
    %498 = vmatpush1.msra.mxu0 0.0
    %499 = vmatprep.subr.mxu0 0.0
    %500 = vmatpush1.msra.mxu0 0.0
    %501 = vmatprep.subr.mxu0 0.0
    %502 = vmatpush1.msra.mxu0 0.0
    %503 = vmatprep.subr.mxu0 0.0
    %504 = vmatpush1.msra.mxu0 0.0
    %505 = vmatprep.subr.mxu0 0.0
    %506 = vmatpush1.msra.mxu0 0.0
    %507 = vmatprep.subr.mxu0 0.0
    %508 = vmatpush1.msra.mxu0 0.0
    %509 = vmatprep.subr.mxu0 0.0
    %510 = vmatpush1.msra.mxu0 0.0
    %511 = vmatprep.subr.mxu0 0.0
    %512 = vmatpush1.msra.mxu0 0.0
    %513 = vmatprep.subr.mxu0 0.0
    %514 = vmatpush1.msra.mxu0 0.0
    %515 = vmatprep.subr.mxu0 0.0
    %516 = vmatpush1.msra.mxu0 0.0
    %517 = vmatprep.subr.mxu0 0.0
    %518 = vmatpush1.msra.mxu0 0.0
    %519 = vmatprep.subr.mxu0 0.0
    %520 = vmatpush1.msra.mxu0 0.0
    %521 = vmatprep.subr.mxu0 0.0
    %522 = vmatpush1.msra.mxu0 0.0
    %523 = vmatprep.subr.mxu0 0.0
    %524 = vmatpush1.msra.mxu0 0.0
    %525 = vmatprep.subr.mxu0 0.0
    %526 = vmatpush1.msra.mxu0 0.0
    %527 = vmatprep.subr.mxu0 0.0
    %528 = vmatpush1.msra.mxu0 0.0
    %529 = vmatprep.subr.mxu0 0.0
    %530 = vmatpush1.msra.mxu0 0.0
    %531 = vmatprep.subr.mxu0 0.0
    %532 = vmatpush1.msra.mxu0 0.0
    %533 = vmatprep.subr.mxu0 0.0
    %534 = vmatpush1.msra.mxu0 0.0
    %535 = vmatprep.subr.mxu0 0.0
    %536 = vmatpush1.msra.mxu0 0.0
    %537 = vmatprep.subr.mxu0 0.0
    %538 = vmatpush1.msra.mxu0 0.0
    %539 = vmatprep.subr.mxu0 0.0
    %540 = vmatpush1.msra.mxu0 0.0
    %541 = vmatprep.subr.mxu0 0.0
    %542 = vmatpush1.msra.mxu0 0.0
    %543 = vmatprep.subr.mxu0 0.0
    %544 = vmatpush1.msra.mxu0 0.0
    %545 = vmatprep.subr.mxu0 0.0
    %546 = vmatpush1.msra.mxu0 0.0
    %547 = vmatprep.subr.mxu0 0.0
    %548 = vmatpush1.msra.mxu0 0.0
    %549 = vmatprep.mubr.f32.mxu0 0.0
    %550 = vmatmul.mubr.f32.gmra.mrb[0].mxu0 %v483
    %v551 = vpop.f32.mrb[0].mxu0
    %v552 = vadd.f32 %v480, %v551
    %v553 = vpop.f32.mrb[0].mxu0
    %554 = vdwg.mxu0
    %555 = vst [vmem:[#allocation10] sm:$0xff] %v552
    // Predicated region
    $region46: #{tpu_custom_call.1} parent=1 // pred_check
      _
    $region47: #{tpu_custom_call.1} parent=1 // pred_check_branch
      %557 = sbr.rel (0) target = $region49
    $region48: #{tpu_custom_call.1} parent=1 // pred_region
      %s559 = ssub.s32 128, 128
      %560 = vsyncadd [#allocation4], %s559
      %s562 = sshll.u32 [#allocation10], 4
      %s563 = int_to_ptr.vmem [resolvable:$true] %s562
      %565 = dma.vmem_to_hbm [thread:$0]  %s563, 128, %s7, [#allocation4]
    $region49: #{tpu_custom_call.1} parent=1 // pred_fallthru
      _
    // Predicated region
    $region50: #{tpu_custom_call.1} parent=1 // pred_check
      _
    $region51: #{tpu_custom_call.1} parent=1 // pred_check_branch
      %567 = sbr.rel (0) target = $region53
    $region52: #{tpu_custom_call.1} parent=1 // pred_region
      %568 = dma.done [#allocation4], 128
    $region53: #{tpu_custom_call.1} parent=1 // pred_fallthru
      _
    %569 = vsyncpa [#allocation3], 1
    %570 = vsyncpa [#allocation6], 1
    %571 = vsyncpa [#allocation9], 1
    %572 = vsyncpa [#allocation4], 1

</llo_original>
